<compile_context>
chip_gen: v6e
topology: v6e:2x2x1
jax: 0.10.0
libtpu: 0.0.40
codegen_flags: <defaults>
</compile_context>

<pallas_src>
import jax
import jax.numpy as jnp
from jax.experimental import pallas as pl
from jax.experimental.pallas import tpu as pltpu

NUM_FOLDS = 10
NUM_CLASSES = 2


def _ensemble_kernel(x_ref, w_ref, b_ref, o_ref):
    # x_ref: [bm, D]   bf16 (lane-dense)
    # w_ref: [NC, D]   bf16 (fold-summed weights, lane-dense)
    # b_ref: [1, NC]   f32  (fold-summed bias)
    # o_ref: [bm, NC]  f32
    logits = jax.lax.dot_general(
        x_ref[...], w_ref[...],
        dimension_numbers=(((1,), (1,)), ((), ())),   # contract D with D (NT)
        preferred_element_type=jnp.float32)            # [bm, NC] f32 on MXU
    o_ref[...] = logits + b_ref[...]                    # f32 epilogue on VPU


def prepare_ensemble_params(weights, biases):
    """One-time (checkpoint-load-time) weight prep — NOT in the hot path.

    weights: [K, D, NC] f32, biases: [K, 1, NC] f32.
    Returns (w_lane [NC, D] bf16, b_sum [1, NC] f32).
    """
    w_sum = jnp.sum(weights.astype(jnp.float32), axis=0)          # [D, NC]
    w_lane = jnp.transpose(w_sum, (1, 0)).astype(jnp.bfloat16)    # [NC, D]
    b_sum = jnp.sum(biases.astype(jnp.float32), axis=0)           # [1, NC]
    return w_lane, b_sum


def _pick_block_b(B):
    # Tile the batch only when it is big enough to matter; keeps per-buffer
    # VMEM bounded (v7x: 64 MiB) and lets the parallel grid axis feed both
    # v7x TensorCores.  Tiny batches run as a single block.
    for bm in (512, 256, 128):
        if B % bm == 0:
            return bm
    return B


def efficient_ensemble_10fold(x_nchw, w_lane, b_sum):
    """x_nchw: [B, C, H, W]; w_lane: [NC, D] bf16; b_sum: [1, NC] f32."""
    B = x_nchw.shape[0]
    D = x_nchw.shape[1] * x_nchw.shape[2] * x_nchw.shape[3]
    NC = w_lane.shape[0]
    assert w_lane.shape[1] == D

    # Flatten + bf16 cast of the activation (single fused XLA convert).
    x_flat = x_nchw.reshape(B, D).astype(jnp.bfloat16)

    bm = _pick_block_b(B)
    grid = (B // bm,)

    cost = pl.CostEstimate(
        flops=2 * B * D * NC,
        transcendentals=0,
        bytes_accessed=B * D * 2 + NC * D * 2 + NC * 4 + B * NC * 4,
    )

    return pl.pallas_call(
        _ensemble_kernel,
        out_shape=jax.ShapeDtypeStruct((B, NC), jnp.float32),
        grid_spec=pltpu.PrefetchScalarGridSpec(
            num_scalar_prefetch=0,
            grid=grid,
            in_specs=[
                pl.BlockSpec((bm, D), lambda i: (i, 0)),   # x tile
                pl.BlockSpec((NC, D), lambda i: (0, 0)),   # summed weights
                pl.BlockSpec((1, NC), lambda i: (0, 0)),   # summed bias
            ],
            out_specs=pl.BlockSpec((bm, NC), lambda i: (i, 0)),
        ),
        compiler_params=pltpu.CompilerParams(
            dimension_semantics=("parallel",)),
        cost_estimate=cost,
    )(x_flat, w_lane, b_sum)


def _reference(x_nchw, weights, biases):
    # Full-f32 per-fold reference mirroring the PyTorch module's fold loop.
    B = x_nchw.shape[0]
    x_flat = x_nchw.reshape(B, -1).astype(jnp.float32)
    out = jnp.zeros((B, weights.shape[-1]), jnp.float32)
    for k in range(weights.shape[0]):
        out = out + x_flat @ weights[k] + biases[k]
    return out


if __name__ == "__main__":
    key = jax.random.PRNGKey(0)
    kx, kw, kb = jax.random.split(key, 3)

    B, C, H, W = 2, 4, 16, 16
    D = C * H * W

    x = jax.random.normal(kx, (B, C, H, W), dtype=jnp.float32)
    # Deterministic synthetic "checkpoints": one weight/bias set per fold.
    weights = 0.05 * jax.random.normal(kw, (NUM_FOLDS, D, NUM_CLASSES),
                                       dtype=jnp.float32)
    biases = 0.01 * jax.random.normal(kb, (NUM_FOLDS, 1, NUM_CLASSES),
                                      dtype=jnp.float32)

    # One-time weight prep (checkpoint-load-time), outside the hot path.
    w_lane, b_sum = prepare_ensemble_params(weights, biases)

    out = efficient_ensemble_10fold(x, w_lane, b_sum)
    out = jax.block_until_ready(out)
    assert out.shape == (B, NUM_CLASSES)

    # 1) Exact-plumbing check: same bf16 operands, f32 accumulation (what the
    #    kernel computes), evaluated with plain XLA.
    x_bf = x.reshape(B, D).astype(jnp.bfloat16)
    ref_same = jax.lax.dot_general(
        x_bf, w_lane,
        dimension_numbers=(((1,), (1,)), ((), ())),
        preferred_element_type=jnp.float32) + b_sum
    assert jnp.allclose(out, ref_same, atol=1e-4, rtol=1e-4)

    # 2) Semantic check against the full-f32 per-fold ensemble (tolerance set
    #    for the bf16 operand rounding; output scale is ~5).
    ref_f32 = _reference(x, weights, biases)
    assert jnp.allclose(out, ref_f32, atol=1e-1, rtol=5e-2)

    print("KERNEL_OK")
</pallas_src>

<mosaic_0001>
module attributes {stable_mosaic.version = 11 : i64} {
  func.func @_ensemble_kernel(%arg0: i32, %arg1: memref<2x1024xbf16, #tpu.memory_space<vmem>>, %arg2: memref<2x1024xbf16, #tpu.memory_space<vmem>>, %arg3: memref<1x2xf32, #tpu.memory_space<vmem>>, %arg4: memref<2x2xf32, #tpu.memory_space<vmem>>) attributes {dimension_semantics = [#tpu.dimension_semantics<parallel>], iteration_bounds = array<i64: 1>, scalar_prefetch = 0 : i64, scratch_operands = 0 : i64, tpu.core_type = #tpu.core_type<tc>, window_params = [{transform_indices = @transform_0, window_bounds = array<i64: 2, 1024>}, {pipeline_mode = #tpu.pipeline_mode<synchronous>, transform_indices = @transform_1, window_bounds = array<i64: 2, 1024>}, {pipeline_mode = #tpu.pipeline_mode<synchronous>, transform_indices = @transform_2, window_bounds = array<i64: 1, 2>}, {transform_indices = @transform_3, window_bounds = array<i64: 2, 2>}]} {
    %c0 = arith.constant 0 : index
    %c0_0 = arith.constant 0 : index
    %0 = vector.load %arg1[%c0, %c0_0] : memref<2x1024xbf16, #tpu.memory_space<vmem>>, vector<2x1024xbf16>
    %c0_1 = arith.constant 0 : index
    %c0_2 = arith.constant 0 : index
    %1 = vector.load %arg2[%c0_1, %c0_2] : memref<2x1024xbf16, #tpu.memory_space<vmem>>, vector<2x1024xbf16>
    %cst = arith.constant dense<0.000000e+00> : vector<2x2xf32>
    %2 = tpu.matmul %0, %1, %cst {dimension_numbers = #tpu.dot_dimension_numbers<[1], [1], [0], [0], [0, 0, 1, 0], [], []>} : vector<2x1024xbf16>, vector<2x1024xbf16>, vector<2x2xf32> -> vector<2x2xf32>
    %c0_3 = arith.constant 0 : index
    %c0_4 = arith.constant 0 : index
    %3 = vector.load %arg3[%c0_3, %c0_4] : memref<1x2xf32, #tpu.memory_space<vmem>>, vector<1x2xf32>
    %4 = vector.broadcast %3 : vector<1x2xf32> to vector<2x2xf32>
    %5 = arith.addf %2, %4 : vector<2x2xf32>
    %c0_5 = arith.constant 0 : index
    %c0_6 = arith.constant 0 : index
    %6 = vector.load %arg4[%c0_5, %c0_6] : memref<2x2xf32, #tpu.memory_space<vmem>>, vector<2x2xf32>
    tpu.vector_store %arg4[%c0_5, %c0_6], %5 {strides = array<i32>} : memref<2x2xf32, #tpu.memory_space<vmem>>, vector<2x2xf32>,
    return
  }
  func.func @transform_0(%arg0: i32) -> (i32, i32) {
    %c0_i32 = arith.constant 0 : i32
    %c0_i32_0 = arith.constant 0 : i32
    return %arg0, %c0_i32 : i32, i32
  }
  func.func @transform_1(%arg0: i32) -> (i32, i32) {
    %c0_i32 = arith.constant 0 : i32
    %c0_i32_0 = arith.constant 0 : i32
    %c0_i32_1 = arith.constant 0 : i32
    return %c0_i32, %c0_i32_0 : i32, i32
  }
  func.func @transform_2(%arg0: i32) -> (i32, i32) {
    %c0_i32 = arith.constant 0 : i32
    %c0_i32_0 = arith.constant 0 : i32
    %c0_i32_1 = arith.constant 0 : i32
    return %c0_i32, %c0_i32_0 : i32, i32
  }
  func.func @transform_3(%arg0: i32) -> (i32, i32) {
    %c0_i32 = arith.constant 0 : i32
    %c0_i32_0 = arith.constant 0 : i32
    return %arg0, %c0_i32 : i32, i32
  }
}

</mosaic_0001>

<llo_original>
// kernel: tpu_custom_call.1
$region0: #{tpu_custom_call.1}
  #allocation0 [shape = 'u32[]', space=smem, size = 0x4, offset = 0x4, fixed_abs, tag = 'smem constant byte address 0x4 - core index']
  #allocation1 [shape = 'u32[144,128]{1,0:T(1,128)}', space=vmem, size = 0x12000, scoped, tag = 'internal scratch']
  %s0 = inlined_call_operand.hbm [shape: bf16[2,1024], index: 0, kind: input, shape index: {}]
  %s1 = inlined_call_operand.hbm [shape: bf16[2,1024], index: 1, kind: input, shape index: {}]
  %s2 = inlined_call_operand.vmem [shape: f32[1,2], index: 2, kind: input, shape index: {}]
  %s3 = inlined_call_operand.hbm [shape: f32[2,2], index: 3, kind: output, shape index: {}]
  %s4 = sld [smem:[#allocation0]]
  $region30: #{tpu_custom_call.1} parent=0
    _
  %s6 = ssub.s32 1, %s4
  %s7 = scalar_select 0, %s6, %s4
  $region1: #{tpu_custom_call.1} parent=0
    #allocation2 [shape = 'u8[4096]{0}', space=vmem, size = 0x1000, scoped, tag = 'input window, operand 0, single buffered']
    #allocation3 [shape = 's32[1]{0}', space=sflag, size = 0x4, scoped, tag = 'scoped memory for tpu_custom_call.1']
    #allocation4 [shape = 's32[1]{0}', space=sflag, size = 0x4, scoped, tag = 'scoped memory for tpu_custom_call.1']
    #allocation5 [shape = 'u8[4096]{0}', space=vmem, size = 0x1000, scoped, tag = 'input window, operand 1, single buffered']
    #allocation6 [shape = 's32[1]{0}', space=sflag, size = 0x4, scoped, tag = 'scoped memory for tpu_custom_call.1']
    #allocation7 [shape = 'u8[1024]{0}', space=vmem, size = 0x400, scoped, tag = 'output window, operand 0, single buffered']
    %8 = vsyncpa [#allocation3], 0
    %9 = vsyncpa [#allocation6], 0
    %10 = vsyncpa [#allocation4], 0
    // Predicated region
    $region2: #{tpu_custom_call.1} parent=1 // pred_check
      _
    $region3: #{tpu_custom_call.1} parent=1 // pred_check_branch
      %12 = sbr.rel (0) target = $region5
    $region4: #{tpu_custom_call.1} parent=1 // pred_region
      %s14 = ssub.s32 128, 128
      %15 = vsyncadd [#allocation3], %s14
      %s17 = sshll.u32 [#allocation2], 4
      %s18 = int_to_ptr.vmem [resolvable:$true] %s17
      %20 = dma.hbm_to_vmem [thread:$0]  %s0, 128, %s18, [#allocation3]
    $region5: #{tpu_custom_call.1} parent=1 // pred_fallthru
      _
    // Predicated region
    $region6: #{tpu_custom_call.1} parent=1 // pred_check
      _
    $region7: #{tpu_custom_call.1} parent=1 // pred_check_branch
      %22 = sbr.rel (0) target = $region9
    $region8: #{tpu_custom_call.1} parent=1 // pred_region
      %s24 = ssub.s32 128, 128
      %25 = vsyncadd [#allocation6], %s24
      %s27 = sshll.u32 [#allocation5], 4
      %s28 = int_to_ptr.vmem [resolvable:$true] %s27
      %30 = dma.hbm_to_vmem [thread:$0]  %s1, 128, %s28, [#allocation6]
    $region9: #{tpu_custom_call.1} parent=1 // pred_fallthru
      _
    // Predicated region
    $region10: #{tpu_custom_call.1} parent=1 // pred_check
      _
    $region11: #{tpu_custom_call.1} parent=1 // pred_check_branch
      %32 = sbr.rel (0) target = $region13
    $region12: #{tpu_custom_call.1} parent=1 // pred_region
      _
    $region13: #{tpu_custom_call.1} parent=1 // pred_fallthru
      _
    // Predicated region
    $region14: #{tpu_custom_call.1} parent=1 // pred_check
      _
    $region15: #{tpu_custom_call.1} parent=1 // pred_check_branch
      %34 = sbr.rel (0) target = $region17
    $region16: #{tpu_custom_call.1} parent=1 // pred_region
      %35 = dma.done [#allocation3], 128
    $region17: #{tpu_custom_call.1} parent=1 // pred_fallthru
      _
    // Predicated region
    $region18: #{tpu_custom_call.1} parent=1 // pred_check
      _
    $region19: #{tpu_custom_call.1} parent=1 // pred_check_branch
      %37 = sbr.rel (0) target = $region21
    $region20: #{tpu_custom_call.1} parent=1 // pred_region
      %38 = dma.done [#allocation6], 128
    $region21: #{tpu_custom_call.1} parent=1 // pred_fallthru
      _
    %v40 = vld [vmem:[#allocation2] sm:$0xff]
    %v41 = vld [vmem:[#allocation5] sm:$0xff]
    %v42 = vld [vmem:[%s2] sm:$0x1]
    %v44 = vlaneseq
    %v45 = vshrl.u32 %v44, 7
    %v46 = vsub.s32 0, %v45
    %v47 = vrot.slane %v42, %v46
    %v50 = vcombine.high %v40, %v40
    %v52 = vunpack.c.l.s4 1966171168
    %v53 = vunpack.c.0.s8 %v52
    %v54 = vlaneseq
    %v55 = vshrl.u32 %v54, 7
    %v56 = vsub.s32 %v53, %v55
    %v57 = vrot.slane %v40, %v56
    %v59 = vunpack.c.l.s4 1966171168
    %v60 = vunpack.c.0.s8 %v59
    %v61 = vlaneseq
    %v62 = vshrl.u32 %v61, 7
    %v63 = vsub.s32 %v60, %v62
    %v64 = vrot.slane %v50, %v63
    %v65 = vcombine.high %v57, %v57
    %v66 = vcombine.high %v64, %v64
    %v68 = vunpack.c.l.s4 1966171168
    %v69 = vunpack.c.0.s8 %v68
    %v70 = vlaneseq
    %v71 = vshrl.u32 %v70, 7
    %v72 = vsub.s32 %v69, %v71
    %v73 = vrot.slane %v57, %v72
    %v75 = vunpack.c.l.s4 1966171168
    %v76 = vunpack.c.0.s8 %v75
    %v77 = vlaneseq
    %v78 = vshrl.u32 %v77, 7
    %v79 = vsub.s32 %v76, %v78
    %v80 = vrot.slane %v64, %v79
    %v82 = vunpack.c.l.s4 1966171168
    %v83 = vunpack.c.0.s8 %v82
    %v84 = vlaneseq
    %v85 = vshrl.u32 %v84, 7
    %v86 = vsub.s32 %v83, %v85
    %v87 = vrot.slane %v65, %v86
    %v89 = vunpack.c.l.s4 1966171168
    %v90 = vunpack.c.0.s8 %v89
    %v91 = vlaneseq
    %v92 = vshrl.u32 %v91, 7
    %v93 = vsub.s32 %v90, %v92
    %v94 = vrot.slane %v66, %v93
    %v95 = vcombine.high %v73, %v73
    %v96 = vcombine.high %v80, %v80
    %v97 = vcombine.high %v87, %v87
    %v98 = vcombine.high %v94, %v94
    %v108 = vcombine.high %v41, %v41
    %v110 = vunpack.c.l.s4 1966171168
    %v111 = vunpack.c.0.s8 %v110
    %v112 = vlaneseq
    %v113 = vshrl.u32 %v112, 7
    %v114 = vsub.s32 %v111, %v113
    %v115 = vrot.slane %v41, %v114
    %v117 = vunpack.c.l.s4 1966171168
    %v118 = vunpack.c.0.s8 %v117
    %v119 = vlaneseq
    %v120 = vshrl.u32 %v119, 7
    %v121 = vsub.s32 %v118, %v120
    %v122 = vrot.slane %v108, %v121
    %v123 = vcombine.high %v115, %v115
    %v124 = vcombine.high %v122, %v122
    %v126 = vunpack.c.l.s4 1966171168
    %v127 = vunpack.c.0.s8 %v126
    %v128 = vlaneseq
    %v129 = vshrl.u32 %v128, 7
    %v130 = vsub.s32 %v127, %v129
    %v131 = vrot.slane %v115, %v130
    %v133 = vunpack.c.l.s4 1966171168
    %v134 = vunpack.c.0.s8 %v133
    %v135 = vlaneseq
    %v136 = vshrl.u32 %v135, 7
    %v137 = vsub.s32 %v134, %v136
    %v138 = vrot.slane %v122, %v137
    %v140 = vunpack.c.l.s4 1966171168
    %v141 = vunpack.c.0.s8 %v140
    %v142 = vlaneseq
    %v143 = vshrl.u32 %v142, 7
    %v144 = vsub.s32 %v141, %v143
    %v145 = vrot.slane %v123, %v144
    %v147 = vunpack.c.l.s4 1966171168
    %v148 = vunpack.c.0.s8 %v147
    %v149 = vlaneseq
    %v150 = vshrl.u32 %v149, 7
    %v151 = vsub.s32 %v148, %v150
    %v152 = vrot.slane %v124, %v151
    %v153 = vcombine.high %v131, %v131
    %v154 = vcombine.high %v138, %v138
    %v155 = vcombine.high %v145, %v145
    %v156 = vcombine.high %v152, %v152
    %165 = vmatprep.subr.bf16.mxu0 0
    %166 = vmatpush1.bf16.xpose.msra.mxu0 0
    %167 = vmatprep.subr.bf16.mxu0 0
    %168 = vmatpush1.bf16.xpose.msra.mxu0 0
    %169 = vmatprep.subr.bf16.mxu0 0
    %170 = vmatpush1.bf16.xpose.msra.mxu0 0
    %171 = vmatprep.subr.bf16.mxu0 0
    %172 = vmatpush1.bf16.xpose.msra.mxu0 0
    %173 = vmatprep.subr.bf16.mxu0 0
    %174 = vmatpush1.bf16.xpose.msra.mxu0 0
    %175 = vmatprep.subr.bf16.mxu0 0
    %176 = vmatpush1.bf16.xpose.msra.mxu0 0
    %177 = vmatprep.subr.bf16.mxu0 0
    %178 = vmatpush1.bf16.xpose.msra.mxu0 0
    %179 = vmatprep.subr.bf16.mxu0 %v145
    %180 = vmatpush1.bf16.xpose.msra.mxu0 %v131
    %181 = vmatprep.subr.bf16.mxu0 0
    %182 = vmatpush2.bf16.xpose.msra.mxu0 0
    %183 = vmatprep.subr.bf16.mxu0 0
    %184 = vmatpush2.bf16.xpose.msra.mxu0 0
    %185 = vmatprep.subr.bf16.mxu0 0
    %186 = vmatpush2.bf16.xpose.msra.mxu0 0
    %187 = vmatprep.subr.bf16.mxu0 0
    %188 = vmatpush2.bf16.xpose.msra.mxu0 0
    %189 = vmatprep.subr.bf16.mxu0 0
    %190 = vmatpush2.bf16.xpose.msra.mxu0 0
    %191 = vmatprep.subr.bf16.mxu0 0
    %192 = vmatpush2.bf16.xpose.msra.mxu0 0
    %193 = vmatprep.subr.bf16.mxu0 0
    %194 = vmatpush2.bf16.xpose.msra.mxu0 0
    %195 = vmatprep.subr.bf16.mxu0 0
    %196 = vmatpush2.bf16.xpose.msra.mxu0 0
    %197 = vmatprep.mubr.bf16.mxu0 %v87
    %198 = vmatmul.mubr.bf16.gmra.mxu0 %v73
    %v199 = vpop.f32.mrf.mxu0
    %v200 = vadd.f32 %v47, %v199
    %v201 = vpop.f32.mrf.mxu0
    %v202 = vpop.f32.mrf.mxu0
    %v203 = vpop.f32.mrf.mxu0
    %204 = vdwg.mxu0
    %205 = vmatprep.subr.bf16.mxu0 0
    %206 = vmatpush1.bf16.xpose.msra.mxu0 0
    %207 = vmatprep.subr.bf16.mxu0 0
    %208 = vmatpush1.bf16.xpose.msra.mxu0 0
    %209 = vmatprep.subr.bf16.mxu0 0
    %210 = vmatpush1.bf16.xpose.msra.mxu0 0
    %211 = vmatprep.subr.bf16.mxu0 0
    %212 = vmatpush1.bf16.xpose.msra.mxu0 0
    %213 = vmatprep.subr.bf16.mxu0 0
    %214 = vmatpush1.bf16.xpose.msra.mxu0 0
    %215 = vmatprep.subr.bf16.mxu0 0
    %216 = vmatpush1.bf16.xpose.msra.mxu0 0
    %217 = vmatprep.subr.bf16.mxu0 0
    %218 = vmatpush1.bf16.xpose.msra.mxu0 0
    %219 = vmatprep.subr.bf16.mxu0 %v155
    %220 = vmatpush1.bf16.xpose.msra.mxu0 %v153
    %221 = vmatprep.subr.bf16.mxu0 0
    %222 = vmatpush2.bf16.xpose.msra.mxu0 0
    %223 = vmatprep.subr.bf16.mxu0 0
    %224 = vmatpush2.bf16.xpose.msra.mxu0 0
    %225 = vmatprep.subr.bf16.mxu0 0
    %226 = vmatpush2.bf16.xpose.msra.mxu0 0
    %227 = vmatprep.subr.bf16.mxu0 0
    %228 = vmatpush2.bf16.xpose.msra.mxu0 0
    %229 = vmatprep.subr.bf16.mxu0 0
    %230 = vmatpush2.bf16.xpose.msra.mxu0 0
    %231 = vmatprep.subr.bf16.mxu0 0
    %232 = vmatpush2.bf16.xpose.msra.mxu0 0
    %233 = vmatprep.subr.bf16.mxu0 0
    %234 = vmatpush2.bf16.xpose.msra.mxu0 0
    %235 = vmatprep.subr.bf16.mxu0 0
    %236 = vmatpush2.bf16.xpose.msra.mxu0 0
    %237 = vmatprep.mubr.bf16.mxu0 %v97
    %238 = vmatmul.mubr.bf16.gmra.mxu0 %v95
    %v239 = vpop.f32.mrf.mxu0
    %v240 = vadd.f32 %v200, %v239
    %v241 = vpop.f32.mrf.mxu0
    %v242 = vpop.f32.mrf.mxu0
    %v243 = vpop.f32.mrf.mxu0
    %244 = vdwg.mxu0
    %245 = vmatprep.subr.bf16.mxu0 0
    %246 = vmatpush1.bf16.xpose.msra.mxu0 0
    %247 = vmatprep.subr.bf16.mxu0 0
    %248 = vmatpush1.bf16.xpose.msra.mxu0 0
    %249 = vmatprep.subr.bf16.mxu0 0
    %250 = vmatpush1.bf16.xpose.msra.mxu0 0
    %251 = vmatprep.subr.bf16.mxu0 0
    %252 = vmatpush1.bf16.xpose.msra.mxu0 0
    %253 = vmatprep.subr.bf16.mxu0 0
    %254 = vmatpush1.bf16.xpose.msra.mxu0 0
    %255 = vmatprep.subr.bf16.mxu0 0
    %256 = vmatpush1.bf16.xpose.msra.mxu0 0
    %257 = vmatprep.subr.bf16.mxu0 0
    %258 = vmatpush1.bf16.xpose.msra.mxu0 0
    %259 = vmatprep.subr.bf16.mxu0 %v152
    %260 = vmatpush1.bf16.xpose.msra.mxu0 %v138
    %261 = vmatprep.subr.bf16.mxu0 0
    %262 = vmatpush2.bf16.xpose.msra.mxu0 0
    %263 = vmatprep.subr.bf16.mxu0 0
    %264 = vmatpush2.bf16.xpose.msra.mxu0 0
    %265 = vmatprep.subr.bf16.mxu0 0
    %266 = vmatpush2.bf16.xpose.msra.mxu0 0
    %267 = vmatprep.subr.bf16.mxu0 0
    %268 = vmatpush2.bf16.xpose.msra.mxu0 0
    %269 = vmatprep.subr.bf16.mxu0 0
    %270 = vmatpush2.bf16.xpose.msra.mxu0 0
    %271 = vmatprep.subr.bf16.mxu0 0
    %272 = vmatpush2.bf16.xpose.msra.mxu0 0
    %273 = vmatprep.subr.bf16.mxu0 0
    %274 = vmatpush2.bf16.xpose.msra.mxu0 0
    %275 = vmatprep.subr.bf16.mxu0 0
    %276 = vmatpush2.bf16.xpose.msra.mxu0 0
    %277 = vmatprep.mubr.bf16.mxu0 %v94
    %278 = vmatmul.mubr.bf16.gmra.mxu0 %v80
    %v279 = vpop.f32.mrf.mxu0
    %v280 = vadd.f32 %v240, %v279
    %v281 = vpop.f32.mrf.mxu0
    %v282 = vpop.f32.mrf.mxu0
    %v283 = vpop.f32.mrf.mxu0
    %284 = vdwg.mxu0
    %285 = vmatprep.subr.bf16.mxu0 0
    %286 = vmatpush1.bf16.xpose.msra.mxu0 0
    %287 = vmatprep.subr.bf16.mxu0 0
    %288 = vmatpush1.bf16.xpose.msra.mxu0 0
    %289 = vmatprep.subr.bf16.mxu0 0
    %290 = vmatpush1.bf16.xpose.msra.mxu0 0
    %291 = vmatprep.subr.bf16.mxu0 0
    %292 = vmatpush1.bf16.xpose.msra.mxu0 0
    %293 = vmatprep.subr.bf16.mxu0 0
    %294 = vmatpush1.bf16.xpose.msra.mxu0 0
    %295 = vmatprep.subr.bf16.mxu0 0
    %296 = vmatpush1.bf16.xpose.msra.mxu0 0
    %297 = vmatprep.subr.bf16.mxu0 0
    %298 = vmatpush1.bf16.xpose.msra.mxu0 0
    %299 = vmatprep.subr.bf16.mxu0 %v156
    %300 = vmatpush1.bf16.xpose.msra.mxu0 %v154
    %301 = vmatprep.subr.bf16.mxu0 0
    %302 = vmatpush2.bf16.xpose.msra.mxu0 0
    %303 = vmatprep.subr.bf16.mxu0 0
    %304 = vmatpush2.bf16.xpose.msra.mxu0 0
    %305 = vmatprep.subr.bf16.mxu0 0
    %306 = vmatpush2.bf16.xpose.msra.mxu0 0
    %307 = vmatprep.subr.bf16.mxu0 0
    %308 = vmatpush2.bf16.xpose.msra.mxu0 0
    %309 = vmatprep.subr.bf16.mxu0 0
    %310 = vmatpush2.bf16.xpose.msra.mxu0 0
    %311 = vmatprep.subr.bf16.mxu0 0
    %312 = vmatpush2.bf16.xpose.msra.mxu0 0
    %313 = vmatprep.subr.bf16.mxu0 0
    %314 = vmatpush2.bf16.xpose.msra.mxu0 0
    %315 = vmatprep.subr.bf16.mxu0 0
    %316 = vmatpush2.bf16.xpose.msra.mxu0 0
    %317 = vmatprep.mubr.bf16.mxu0 %v98
    %318 = vmatmul.mubr.bf16.gmra.mxu0 %v96
    %v319 = vpop.f32.mrf.mxu0
    %v320 = vadd.f32 %v280, %v319
    %v321 = vpop.f32.mrf.mxu0
    %v322 = vpop.f32.mrf.mxu0
    %v323 = vpop.f32.mrf.mxu0
    %324 = vdwg.mxu0
    %vm325 = vcmask 9216
    %326 = vst.msk [vmem:[#allocation7] sm:$0x3] %vm325, %v320
    // Predicated region
    $region22: #{tpu_custom_call.1} parent=1 // pred_check
      _
    $region23: #{tpu_custom_call.1} parent=1 // pred_check_branch
      %328 = sbr.rel (0) target = $region25
    $region24: #{tpu_custom_call.1} parent=1 // pred_region
      %s330 = ssub.s32 32, 32
      %331 = vsyncadd [#allocation4], %s330
      %s333 = sshll.u32 [#allocation7], 4
      %s334 = int_to_ptr.vmem [resolvable:$true] %s333
      %336 = dma.vmem_to_hbm [thread:$0]  %s334, 32, %s3, [#allocation4]
    $region25: #{tpu_custom_call.1} parent=1 // pred_fallthru
      _
    // Predicated region
    $region26: #{tpu_custom_call.1} parent=1 // pred_check
      _
    $region27: #{tpu_custom_call.1} parent=1 // pred_check_branch
      %338 = sbr.rel (0) target = $region29
    $region28: #{tpu_custom_call.1} parent=1 // pred_region
      %339 = dma.done [#allocation4], 32
    $region29: #{tpu_custom_call.1} parent=1 // pred_fallthru
      _
    %340 = vsyncpa [#allocation3], 1
    %341 = vsyncpa [#allocation6], 1
    %342 = vsyncpa [#allocation4], 1

</llo_original>
